<compile_context>
chip_gen: v6e
topology: v6e:2x2x1
jax: 0.10.0
libtpu: 0.0.40
codegen_flags: <defaults>
</compile_context>

<pallas_src>
import functools
import math

import jax
import jax.numpy as jnp
from jax import lax
from jax.experimental import pallas as pl
from jax.experimental.pallas import tpu as pltpu


# Weights up to this size are kept fully resident per grid step (read once).
_WEIGHT_RESIDENT_BYTES = 8 * 1024 * 1024


@functools.lru_cache(maxsize=1)
def _vmem_limit():
    """~3/4 of physical VMEM: 96 MiB on v5e/v6e (128 MiB), 48 MiB on v7x (64 MiB)."""
    cap = 64 * 1024 * 1024
    try:
        cap = int(pltpu.get_tpu_info().vmem_capacity_bytes)
    except Exception:
        pass
    if not cap or cap < (32 << 20):
        cap = 64 << 20
    return (3 * cap) // 4


def _pick_row_tile(n):
    # Largest sublane-aligned tile that divides n (else the full dim).
    for t in (512, 256, 128, 64, 32, 16, 8):
        if n % t == 0:
            return t
    return n


def _pick_lane_tile(n):
    # Largest 128-multiple tile that divides n (else the full dim).
    for t in (512, 384, 256, 128):
        if n % t == 0:
            return t
    return n


# ----------------------------- projection kernels ---------------------------

def _linear_kernel(x_ref, w_ref, b_ref, o_ref):
    # x: (tn, D_in); w: (td, D_in) [PyTorch (out,in) layout]; b: (1, td).
    # Contract last dims of both operands -> no in-kernel transpose.
    acc = lax.dot_general(
        x_ref[...], w_ref[...],
        dimension_numbers=(((1,), (1,)), ((), ())),
        preferred_element_type=jnp.float32,
    )
    o_ref[...] = (acc + b_ref[...]).astype(o_ref.dtype)


def _linear_specs(n, d_in, d_out, tn, act_bytes, weight_bytes):
    """Grid/specs so that the dominant operand is read from HBM only once."""
    if weight_bytes <= _WEIGHT_RESIDENT_BYTES:
        # Full d_out per step: weight, activation and output each DMA'd once.
        grid = (n // tn,)
        x_spec = pl.BlockSpec((tn, d_in), lambda i: (i, 0))
        w_spec = pl.BlockSpec((d_out, d_in), lambda i: (0, 0))
        b_spec = pl.BlockSpec((1, d_out), lambda i: (0, 0))
        o_spec = pl.BlockSpec((tn, d_out), lambda i: (i, 0))
        dims = ("parallel",)
    else:
        td = _pick_lane_tile(d_out)
        if act_bytes >= weight_bytes:
            # Activation resident across the (inner) out-lane axis -> read once.
            grid = (n // tn, d_out // td)
            x_spec = pl.BlockSpec((tn, d_in), lambda i, j: (i, 0))
            w_spec = pl.BlockSpec((td, d_in), lambda i, j: (j, 0))
            b_spec = pl.BlockSpec((1, td), lambda i, j: (0, j))
            o_spec = pl.BlockSpec((tn, td), lambda i, j: (i, j))
        else:
            # Weight resident across the (inner) row axis -> read once.
            grid = (d_out // td, n // tn)
            x_spec = pl.BlockSpec((tn, d_in), lambda j, i: (i, 0))
            w_spec = pl.BlockSpec((td, d_in), lambda j, i: (j, 0))
            b_spec = pl.BlockSpec((1, td), lambda j, i: (0, j))
            o_spec = pl.BlockSpec((tn, td), lambda j, i: (i, j))
        dims = ("parallel", "parallel")
    return grid, x_spec, w_spec, b_spec, o_spec, dims


def pallas_linear(x2d, w, b):
    n, d_in = x2d.shape
    d_out = w.shape[0]
    tn = _pick_row_tile(n)
    itemsize = jnp.dtype(w.dtype).itemsize
    act_bytes = n * d_in * jnp.dtype(x2d.dtype).itemsize
    weight_bytes = d_out * d_in * itemsize
    grid, x_spec, w_spec, b_spec, o_spec, dims = _linear_specs(
        n, d_in, d_out, tn, act_bytes, weight_bytes)
    return pl.pallas_call(
        _linear_kernel,
        out_shape=jax.ShapeDtypeStruct((n, d_out), x2d.dtype),
        grid=grid,
        in_specs=[x_spec, w_spec, b_spec],
        out_specs=o_spec,
        compiler_params=pltpu.CompilerParams(
            dimension_semantics=dims,
            vmem_limit_bytes=_vmem_limit(),
        ),
    )(x2d, w, b.reshape(1, d_out))


def _kv_linear_kernel(y_ref, wk_ref, bk_ref, wv_ref, bv_ref, k_ref, v_ref):
    # Fused K/V projection: one y tile feeds both matmuls.
    y = y_ref[...]
    k = lax.dot_general(y, wk_ref[...], (((1,), (1,)), ((), ())),
                        preferred_element_type=jnp.float32) + bk_ref[...]
    v = lax.dot_general(y, wv_ref[...], (((1,), (1,)), ((), ())),
                        preferred_element_type=jnp.float32) + bv_ref[...]
    k_ref[...] = k.astype(k_ref.dtype)
    v_ref[...] = v.astype(v_ref.dtype)


def pallas_kv_linear(y2d, wk, bk, wv, bv):
    n, d_in = y2d.shape
    d_out = wk.shape[0]
    tn = _pick_row_tile(n)
    itemsize = jnp.dtype(wk.dtype).itemsize
    act_bytes = n * d_in * jnp.dtype(y2d.dtype).itemsize
    weight_bytes = 2 * d_out * d_in * itemsize  # both K and V weights
    grid, y_spec, w_spec, b_spec, o_spec, dims = _linear_specs(
        n, d_in, d_out, tn, act_bytes, weight_bytes)
    return pl.pallas_call(
        _kv_linear_kernel,
        out_shape=(jax.ShapeDtypeStruct((n, d_out), y2d.dtype),
                   jax.ShapeDtypeStruct((n, d_out), y2d.dtype)),
        grid=grid,
        in_specs=[y_spec, w_spec, b_spec, w_spec, b_spec],
        out_specs=(o_spec, o_spec),
        compiler_params=pltpu.CompilerParams(
            dimension_semantics=dims,
            vmem_limit_bytes=_vmem_limit(),
        ),
    )(y2d, wk, bk.reshape(1, d_out), wv, bv.reshape(1, d_out))


# ------------------------------ attention kernel ----------------------------

def _flash_attn_kernel(q_ref, k_ref, v_ref, o_ref, m_ref, l_ref, acc_ref,
                       *, n_heads, d_head):
    # q: (1, tq, H*dh); k/v: (1, tk, H*dh) — one batch element, all heads.
    # Heads split by static lane slices (no reshape/transpose in-kernel);
    # online softmax over the KV chunks (innermost "arbitrary" grid axis).
    # The 1/sqrt(d_head) scale is already folded into the q projection.
    kv_i = pl.program_id(2)

    @pl.when(kv_i == 0)
    def _():
        m_ref[...] = jnp.full(m_ref.shape, -jnp.inf, jnp.float32)
        l_ref[...] = jnp.zeros(l_ref.shape, jnp.float32)
        acc_ref[...] = jnp.zeros(acc_ref.shape, jnp.float32)

    q_all = q_ref[0]   # (tq, H*dh)
    k_all = k_ref[0]   # (tk, H*dh)
    v_all = v_ref[0]   # (tk, H*dh)

    for h in range(n_heads):
        lo = h * d_head
        hi = lo + d_head
        s = lax.dot_general(q_all[:, lo:hi], k_all[:, lo:hi],
                            (((1,), (1,)), ((), ())),
                            preferred_element_type=jnp.float32)   # (tq, tk)
        m_prev = m_ref[h]                                          # (tq, 1)
        m_new = jnp.maximum(m_prev, jnp.max(s, axis=-1, keepdims=True))
        alpha = jnp.exp(m_prev - m_new)
        p = jnp.exp(s - m_new)
        acc_ref[h] = alpha * acc_ref[h] + jnp.dot(
            p.astype(v_all.dtype), v_all[:, lo:hi],
            preferred_element_type=jnp.float32)                   # (tq, dh)
        l_ref[h] = alpha * l_ref[h] + jnp.sum(p, axis=-1, keepdims=True)
        m_ref[h] = m_new

    @pl.when(kv_i == pl.num_programs(2) - 1)
    def _():
        inv_l = pl.reciprocal(l_ref[...], approx=True)             # (H, tq, 1)
        out = acc_ref[...] * inv_l                                 # (H, tq, dh)
        # Single lane-dense (tq, H*dh) store instead of H narrow masked stores.
        o_ref[0] = jnp.concatenate(
            [out[h] for h in range(n_heads)], axis=-1).astype(o_ref.dtype)


def pallas_attention(q, k, v, n_heads, d_head):
    b, sq, d = q.shape
    skv = k.shape[1]
    tq = _pick_row_tile(sq)
    tk = _pick_row_tile(skv)
    kernel = functools.partial(_flash_attn_kernel, n_heads=n_heads, d_head=d_head)
    # KV (reduction) axis innermost + "arbitrary"; batch and q-row axes are
    # "parallel" so megacore (v7x) has work as long as b * (sq//tq) >= 2.
    grid = (b, sq // tq, skv // tk)
    return pl.pallas_call(
        kernel,
        out_shape=jax.ShapeDtypeStruct((b, sq, d), q.dtype),
        grid=grid,
        in_specs=[
            pl.BlockSpec((1, tq, d), lambda bi, qi, ki: (bi, qi, 0)),
            pl.BlockSpec((1, tk, d), lambda bi, qi, ki: (bi, ki, 0)),
            pl.BlockSpec((1, tk, d), lambda bi, qi, ki: (bi, ki, 0)),
        ],
        out_specs=pl.BlockSpec((1, tq, d), lambda bi, qi, ki: (bi, qi, 0)),
        scratch_shapes=[
            pltpu.VMEM((n_heads, tq, 1), jnp.float32),       # running max m
            pltpu.VMEM((n_heads, tq, 1), jnp.float32),       # running sum l
            pltpu.VMEM((n_heads, tq, d_head), jnp.float32),  # output accumulator
        ],
        compiler_params=pltpu.CompilerParams(
            dimension_semantics=("parallel", "parallel", "arbitrary"),
            vmem_limit_bytes=_vmem_limit(),
        ),
    )(q, k, v)


# ------------------------------ forward wrapper ------------------------------

def cross_attention_forward(x, y, params, n_heads):
    """Pallas implementation of CrossAttention.forward."""
    b, sq, d_embed = x.shape
    _, skv, d_cross = y.shape
    # The PyTorch reference views k/v with the query sequence length, which
    # requires Seq_Q == Seq_KV; reproduce that contract.
    assert skv == sq, "CrossAttention reference requires Seq_Q == Seq_KV"
    assert d_embed % n_heads == 0
    d_head = d_embed // n_heads
    scale = 1.0 / math.sqrt(d_head)

    # Fold the 1/sqrt(d_head) scale into the q projection (free: one small
    # elementwise op on the weights instead of a per-head multiply in-kernel).
    wq = (params["wq"] * scale).astype(params["wq"].dtype)
    bq = (params["bq"] * scale).astype(params["bq"].dtype)

    q = pallas_linear(x.reshape(b * sq, d_embed), wq, bq)
    k, v = pallas_kv_linear(y.reshape(b * skv, d_cross),
                            params["wk"], params["bk"],
                            params["wv"], params["bv"])

    # Free reshapes only (no XLA transposes): heads are split inside the
    # attention kernel by slicing the lane (d_embed) dimension.
    q = q.reshape(b, sq, d_embed)
    k = k.reshape(b, skv, d_embed)
    v = v.reshape(b, skv, d_embed)

    out = pallas_attention(q, k, v, n_heads, d_head)
    out = pallas_linear(out.reshape(b * sq, d_embed), params["wo"], params["bo"])
    return out.reshape(b, sq, d_embed)


# ------------------------------ reference (JAX) -----------------------------

def cross_attention_reference(x, y, params, n_heads):
    b, sq, d_embed = x.shape
    d_head = d_embed // n_heads
    q = x @ params["wq"].T + params["bq"]
    k = y @ params["wk"].T + params["bk"]
    v = y @ params["wv"].T + params["bv"]
    q = q.reshape(b, sq, n_heads, d_head).transpose(0, 2, 1, 3)
    k = k.reshape(b, sq, n_heads, d_head).transpose(0, 2, 1, 3)
    v = v.reshape(b, sq, n_heads, d_head).transpose(0, 2, 1, 3)
    w = jnp.einsum("bhqd,bhkd->bhqk", q, k) / math.sqrt(d_head)
    w = jax.nn.softmax(w, axis=-1)
    o = jnp.einsum("bhqk,bhkd->bhqd", w, v)
    o = o.transpose(0, 2, 1, 3).reshape(b, sq, d_embed)
    return o @ params["wo"].T + params["bo"]


# ---------------------------------- main ------------------------------------

def make_params(key, d_embed, d_cross, dtype=jnp.float32):
    ks = jax.random.split(key, 8)

    def linear_init(kw, kb, d_out, d_in):
        bound = 1.0 / math.sqrt(d_in)
        w = jax.random.uniform(kw, (d_out, d_in), jnp.float32, -bound, bound)
        bias = jax.random.uniform(kb, (d_out,), jnp.float32, -bound, bound)
        return w.astype(dtype), bias.astype(dtype)

    wq, bq = linear_init(ks[0], ks[1], d_embed, d_embed)
    wk, bk = linear_init(ks[2], ks[3], d_embed, d_cross)
    wv, bv = linear_init(ks[4], ks[5], d_embed, d_cross)
    wo, bo = linear_init(ks[6], ks[7], d_embed, d_embed)
    return dict(wq=wq, bq=bq, wk=wk, bk=bk, wv=wv, bv=bv, wo=wo, bo=bo)


if __name__ == "__main__":
    B, SEQ, D_EMBED, D_CROSS, N_HEADS = 2, 8, 32, 24, 4

    key = jax.random.PRNGKey(0)
    kx, ky, kp = jax.random.split(key, 3)
    x = jax.random.normal(kx, (B, SEQ, D_EMBED), jnp.float32)
    y = jax.random.normal(ky, (B, SEQ, D_CROSS), jnp.float32)
    params = make_params(kp, D_EMBED, D_CROSS)

    # float32 path (tight check; approx reciprocal contributes ~1e-4).
    out = jax.block_until_ready(cross_attention_forward(x, y, params, N_HEADS))
    ref = cross_attention_reference(x, y, params, N_HEADS)
    assert out.shape == (B, SEQ, D_EMBED)
    assert jnp.allclose(out, ref, atol=2e-3, rtol=2e-3), "f32 mismatch vs reference"

    # bfloat16 path (halves HBM/VMEM traffic, bf16 MXU throughput); compare
    # against an f32 reference evaluated on the same bf16-rounded inputs.
    xb = x.astype(jnp.bfloat16)
    yb = y.astype(jnp.bfloat16)
    pb = {name: p.astype(jnp.bfloat16) for name, p in params.items()}
    outb = jax.block_until_ready(cross_attention_forward(xb, yb, pb, N_HEADS))
    refb = cross_attention_reference(
        xb.astype(jnp.float32), yb.astype(jnp.float32),
        {name: p.astype(jnp.float32) for name, p in pb.items()}, N_HEADS)
    assert jnp.allclose(outb.astype(jnp.float32), refb, atol=1e-1, rtol=1e-1), \
        "bf16 mismatch vs reference"

    print("KERNEL_OK")
</pallas_src>

<mosaic_0001>
module attributes {stable_mosaic.version = 11 : i64} {
  func.func @_linear_kernel(%arg0: i32, %arg1: memref<16x32xf32, #tpu.memory_space<vmem>>, %arg2: memref<32x32xf32, #tpu.memory_space<vmem>>, %arg3: memref<1x32xf32, #tpu.memory_space<vmem>>, %arg4: memref<16x32xf32, #tpu.memory_space<vmem>>) attributes {dimension_semantics = [#tpu.dimension_semantics<parallel>], iteration_bounds = array<i64: 1>, scalar_prefetch = 0 : i64, scratch_operands = 0 : i64, tpu.core_type = #tpu.core_type<tc>, window_params = [{transform_indices = @transform_0, window_bounds = array<i64: 16, 32>}, {pipeline_mode = #tpu.pipeline_mode<synchronous>, transform_indices = @transform_1, window_bounds = array<i64: 32, 32>}, {pipeline_mode = #tpu.pipeline_mode<synchronous>, transform_indices = @transform_2, window_bounds = array<i64: 1, 32>}, {transform_indices = @transform_3, window_bounds = array<i64: 16, 32>}]} {
    %c0 = arith.constant 0 : index
    %c0_0 = arith.constant 0 : index
    %0 = vector.load %arg1[%c0, %c0_0] : memref<16x32xf32, #tpu.memory_space<vmem>>, vector<16x32xf32>
    %c0_1 = arith.constant 0 : index
    %c0_2 = arith.constant 0 : index
    %1 = vector.load %arg2[%c0_1, %c0_2] : memref<32x32xf32, #tpu.memory_space<vmem>>, vector<32x32xf32>
    %cst = arith.constant dense<0.000000e+00> : vector<16x32xf32>
    %2 = tpu.matmul %0, %1, %cst {dimension_numbers = #tpu.dot_dimension_numbers<[1], [1], [0], [0], [0, 0, 1, 0], [], []>} : vector<16x32xf32>, vector<32x32xf32>, vector<16x32xf32> -> vector<16x32xf32>
    %c0_3 = arith.constant 0 : index
    %c0_4 = arith.constant 0 : index
    %3 = vector.load %arg3[%c0_3, %c0_4] : memref<1x32xf32, #tpu.memory_space<vmem>>, vector<1x32xf32>
    %4 = vector.broadcast %3 : vector<1x32xf32> to vector<16x32xf32>
    %5 = arith.addf %2, %4 : vector<16x32xf32>
    %c0_5 = arith.constant 0 : index
    %c0_6 = arith.constant 0 : index
    %6 = vector.load %arg4[%c0_5, %c0_6] : memref<16x32xf32, #tpu.memory_space<vmem>>, vector<16x32xf32>
    tpu.vector_store %arg4[%c0_5, %c0_6], %5 {strides = array<i32>} : memref<16x32xf32, #tpu.memory_space<vmem>>, vector<16x32xf32>,
    return
  }
  func.func @transform_0(%arg0: i32) -> (i32, i32) {
    %c0_i32 = arith.constant 0 : i32
    %c0_i32_0 = arith.constant 0 : i32
    return %arg0, %c0_i32 : i32, i32
  }
  func.func @transform_1(%arg0: i32) -> (i32, i32) {
    %c0_i32 = arith.constant 0 : i32
    %c0_i32_0 = arith.constant 0 : i32
    %c0_i32_1 = arith.constant 0 : i32
    return %c0_i32, %c0_i32_0 : i32, i32
  }
  func.func @transform_2(%arg0: i32) -> (i32, i32) {
    %c0_i32 = arith.constant 0 : i32
    %c0_i32_0 = arith.constant 0 : i32
    %c0_i32_1 = arith.constant 0 : i32
    return %c0_i32, %c0_i32_0 : i32, i32
  }
  func.func @transform_3(%arg0: i32) -> (i32, i32) {
    %c0_i32 = arith.constant 0 : i32
    %c0_i32_0 = arith.constant 0 : i32
    return %arg0, %c0_i32 : i32, i32
  }
}

</mosaic_0001>

<llo_original>
// kernel: tpu_custom_call.1
$region0: #{tpu_custom_call.1}
  #allocation0 [shape = 'u32[]', space=smem, size = 0x4, offset = 0x4, fixed_abs, tag = 'smem constant byte address 0x4 - core index']
  #allocation1 [shape = 'u32[144,128]{1,0:T(1,128)}', space=vmem, size = 0x12000, scoped, tag = 'internal scratch']
  %s0 = inlined_call_operand.hbm [shape: f32[16,32], index: 0, kind: input, shape index: {}]
  %s1 = inlined_call_operand.hbm [shape: f32[32,32], index: 1, kind: input, shape index: {}]
  %s2 = inlined_call_operand.vmem [shape: f32[1,32], index: 2, kind: input, shape index: {}]
  %s3 = inlined_call_operand.hbm [shape: f32[16,32], index: 3, kind: output, shape index: {}]
  %s4 = sld [smem:[#allocation0]]
  $region30: #{tpu_custom_call.1} parent=0
    _
  %s6 = ssub.s32 1, %s4
  %s7 = scalar_select 0, %s6, %s4
  $region1: #{tpu_custom_call.1} parent=0
    #allocation2 [shape = 'u8[8192]{0}', space=vmem, size = 0x2000, scoped, tag = 'input window, operand 0, single buffered']
    #allocation3 [shape = 's32[1]{0}', space=sflag, size = 0x4, scoped, tag = 'scoped memory for tpu_custom_call.1']
    #allocation4 [shape = 's32[1]{0}', space=sflag, size = 0x4, scoped, tag = 'scoped memory for tpu_custom_call.1']
    #allocation5 [shape = 'u8[16384]{0}', space=vmem, size = 0x4000, scoped, tag = 'input window, operand 1, single buffered']
    #allocation6 [shape = 's32[1]{0}', space=sflag, size = 0x4, scoped, tag = 'scoped memory for tpu_custom_call.1']
    #allocation7 [shape = 'u8[8192]{0}', space=vmem, size = 0x2000, scoped, tag = 'output window, operand 0, single buffered']
    %8 = vsyncpa [#allocation3], 0
    %9 = vsyncpa [#allocation6], 0
    %10 = vsyncpa [#allocation4], 0
    // Predicated region
    $region2: #{tpu_custom_call.1} parent=1 // pred_check
      _
    $region3: #{tpu_custom_call.1} parent=1 // pred_check_branch
      %12 = sbr.rel (0) target = $region5
    $region4: #{tpu_custom_call.1} parent=1 // pred_region
      %s14 = ssub.s32 256, 256
      %15 = vsyncadd [#allocation3], %s14
      %s16 = sshll.u32 [#allocation2], 4
      %s17 = int_to_ptr.vmem [resolvable:$true] %s16
      %22 = dma.hbm_to_vmem [thread:$0]  %s0, 256, %s17, [#allocation3], 128, 128, 8
    $region5: #{tpu_custom_call.1} parent=1 // pred_fallthru
      _
    // Predicated region
    $region6: #{tpu_custom_call.1} parent=1 // pred_check
      _
    $region7: #{tpu_custom_call.1} parent=1 // pred_check_branch
      %24 = sbr.rel (0) target = $region9
    $region8: #{tpu_custom_call.1} parent=1 // pred_region
      %s26 = ssub.s32 512, 512
      %27 = vsyncadd [#allocation6], %s26
      %s28 = sshll.u32 [#allocation5], 4
      %s29 = int_to_ptr.vmem [resolvable:$true] %s28
      %34 = dma.hbm_to_vmem [thread:$0]  %s1, 512, %s29, [#allocation6], 128, 128, 8
    $region9: #{tpu_custom_call.1} parent=1 // pred_fallthru
      _
    // Predicated region
    $region10: #{tpu_custom_call.1} parent=1 // pred_check
      _
    $region11: #{tpu_custom_call.1} parent=1 // pred_check_branch
      %36 = sbr.rel (0) target = $region13
    $region12: #{tpu_custom_call.1} parent=1 // pred_region
      _
    $region13: #{tpu_custom_call.1} parent=1 // pred_fallthru
      _
    // Predicated region
    $region14: #{tpu_custom_call.1} parent=1 // pred_check
      _
    $region15: #{tpu_custom_call.1} parent=1 // pred_check_branch
      %38 = sbr.rel (0) target = $region17
    $region16: #{tpu_custom_call.1} parent=1 // pred_region
      %39 = dma.done [#allocation3], 256
    $region17: #{tpu_custom_call.1} parent=1 // pred_fallthru
      _
    // Predicated region
    $region18: #{tpu_custom_call.1} parent=1 // pred_check
      _
    $region19: #{tpu_custom_call.1} parent=1 // pred_check_branch
      %41 = sbr.rel (0) target = $region21
    $region20: #{tpu_custom_call.1} parent=1 // pred_region
      %42 = dma.done [#allocation6], 512
    $region21: #{tpu_custom_call.1} parent=1 // pred_fallthru
      _
    %v43 = vld [vmem:[#allocation2] sm:$0xff]
    %v44 = vld [vmem:[#allocation2 + $0x8] sm:$0xff]
    %v45 = vld [vmem:[#allocation5] sm:$0xff]
    %v46 = vld [vmem:[#allocation5 + $0x8] sm:$0xff]
    %v47 = vld [vmem:[#allocation5 + $0x10] sm:$0xff]
    %v48 = vld [vmem:[#allocation5 + $0x18] sm:$0xff]
    %v49 = vld [vmem:[%s2] sm:$0x1]
    %v51 = vlaneseq
    %v52 = vshrl.u32 %v51, 7
    %v53 = vsub.s32 0, %v52
    %v54 = vrot.slane %v49, %v53
    %vm56 = vcmask 261120
    %v58 = vsel %vm56, %v43, 0
    %v61 = vsel %vm56, %v44, 0
    %v64 = vsel %vm56, %v45, 0
    %v67 = vsel %vm56, %v46, 0
    %v70 = vsel %vm56, %v47, 0
    %v73 = vsel %vm56, %v48, 0
    %75 = vmatprep.subr.mxu0 0.0
    %76 = vmatpush1.xpose.msra.mxu0 0.0
    %77 = vmatprep.subr.mxu0 0.0
    %78 = vmatpush1.xpose.msra.mxu0 0.0
    %79 = vmatprep.subr.mxu0 0.0
    %80 = vmatpush1.xpose.msra.mxu0 0.0
    %81 = vmatprep.subr.mxu0 0.0
    %82 = vmatpush1.xpose.msra.mxu0 0.0
    %83 = vmatprep.subr.mxu0 0.0
    %84 = vmatpush1.xpose.msra.mxu0 0.0
    %85 = vmatprep.subr.mxu0 0.0
    %86 = vmatpush1.xpose.msra.mxu0 0.0
    %87 = vmatprep.subr.mxu0 0.0
    %88 = vmatpush1.xpose.msra.mxu0 0.0
    %89 = vmatprep.subr.mxu0 0.0
    %90 = vmatpush1.xpose.msra.mxu0 0.0
    %91 = vmatprep.subr.mxu0 0.0
    %92 = vmatpush1.xpose.msra.mxu0 0.0
    %93 = vmatprep.subr.mxu0 0.0
    %94 = vmatpush1.xpose.msra.mxu0 0.0
    %95 = vmatprep.subr.mxu0 0.0
    %96 = vmatpush1.xpose.msra.mxu0 0.0
    %97 = vmatprep.subr.mxu0 0.0
    %98 = vmatpush1.xpose.msra.mxu0 0.0
    %99 = vmatprep.subr.mxu0 0.0
    %100 = vmatpush1.xpose.msra.mxu0 %v73
    %101 = vmatprep.subr.mxu0 0.0
    %102 = vmatpush1.xpose.msra.mxu0 %v70
    %103 = vmatprep.subr.mxu0 0.0
    %104 = vmatpush1.xpose.msra.mxu0 %v67
    %105 = vmatprep.subr.mxu0 0.0
    %106 = vmatpush1.xpose.msra.mxu0 %v64
    %107 = vmatprep.subr.mxu0 0.0
    %108 = vmatpush2.xpose.msra.mxu0 0.0
    %109 = vmatprep.subr.mxu0 0.0
    %110 = vmatpush2.xpose.msra.mxu0 0.0
    %111 = vmatprep.subr.mxu0 0.0
    %112 = vmatpush2.xpose.msra.mxu0 0.0
    %113 = vmatprep.subr.mxu0 0.0
    %114 = vmatpush2.xpose.msra.mxu0 0.0
    %115 = vmatprep.subr.mxu0 0.0
    %116 = vmatpush2.xpose.msra.mxu0 0.0
    %117 = vmatprep.subr.mxu0 0.0
    %118 = vmatpush2.xpose.msra.mxu0 0.0
    %119 = vmatprep.subr.mxu0 0.0
    %120 = vmatpush2.xpose.msra.mxu0 0.0
    %121 = vmatprep.subr.mxu0 0.0
    %122 = vmatpush2.xpose.msra.mxu0 0.0
    %123 = vmatprep.subr.mxu0 0.0
    %124 = vmatpush2.xpose.msra.mxu0 0.0
    %125 = vmatprep.subr.mxu0 0.0
    %126 = vmatpush2.xpose.msra.mxu0 0.0
    %127 = vmatprep.subr.mxu0 0.0
    %128 = vmatpush2.xpose.msra.mxu0 0.0
    %129 = vmatprep.subr.mxu0 0.0
    %130 = vmatpush2.xpose.msra.mxu0 0.0
    %131 = vmatprep.subr.mxu0 0.0
    %132 = vmatpush2.xpose.msra.mxu0 0.0
    %133 = vmatprep.subr.mxu0 0.0
    %134 = vmatpush2.xpose.msra.mxu0 0.0
    %135 = vmatprep.subr.mxu0 0.0
    %136 = vmatpush2.xpose.msra.mxu0 0.0
    %137 = vmatprep.subr.mxu0 0.0
    %138 = vmatpush2.xpose.msra.mxu0 0.0
    %139 = vmatprep.mubr.f32.mxu0 0.0
    %140 = vmatmul.mubr.f32.gmra.mxu0 %v58
    %v141 = vpop.f32.mrf.mxu0
    %v142 = vadd.f32 %v54, %v141
    %v143 = vpop.f32.mrf.mxu0
    %144 = vmatprep.mubr.f32.mxu0 0.0
    %145 = vmatmul.mubr.f32.gmra.mxu0 %v61
    %v146 = vpop.f32.mrf.mxu0
    %v147 = vadd.f32 %v54, %v146
    %v148 = vpop.f32.mrf.mxu0
    %149 = vdwg.mxu0
    %150 = vst.msk [vmem:[#allocation7] sm:$0xff] %vm56, %v142
    %151 = vst.msk [vmem:[#allocation7 + $0x8] sm:$0xff] %vm56, %v147
    // Predicated region
    $region22: #{tpu_custom_call.1} parent=1 // pred_check
      _
    $region23: #{tpu_custom_call.1} parent=1 // pred_check_branch
      %153 = sbr.rel (0) target = $region25
    $region24: #{tpu_custom_call.1} parent=1 // pred_region
      %s155 = ssub.s32 256, 256
      %156 = vsyncadd [#allocation4], %s155
      %s157 = sshll.u32 [#allocation7], 4
      %s158 = int_to_ptr.vmem [resolvable:$true] %s157
      %163 = dma.vmem_to_hbm [thread:$0]  %s158, 256, %s3, [#allocation4], 128, 128, 8
    $region25: #{tpu_custom_call.1} parent=1 // pred_fallthru
      _
    // Predicated region
    $region26: #{tpu_custom_call.1} parent=1 // pred_check
      _
    $region27: #{tpu_custom_call.1} parent=1 // pred_check_branch
      %165 = sbr.rel (0) target = $region29
    $region28: #{tpu_custom_call.1} parent=1 // pred_region
      %166 = dma.done [#allocation4], 256
    $region29: #{tpu_custom_call.1} parent=1 // pred_fallthru
      _
    %167 = vsyncpa [#allocation3], 1
    %168 = vsyncpa [#allocation6], 1
    %169 = vsyncpa [#allocation4], 1

</llo_original>
